<compile_context>
chip_gen: v6e
topology: v6e:2x2x1
jax: 0.10.0
libtpu: 0.0.40
codegen_flags: <defaults>
</compile_context>

<pallas_src>
import jax
import jax.numpy as jnp
from jax.experimental import pallas as pl
from jax.experimental.pallas import tpu as pltpu

_TARGET_BLOCK_BYTES = 4 * 1024 * 1024   # <= 4 MiB per block (v7x-safe)
_VMEM_LIMIT_BYTES = 32 * 1024 * 1024    # double-buffered in+out fits easily
_BLOCK_1D = 128 * 1024                  # ragged fallback block (elements)


def _round_up(x, m):
    return ((x + m - 1) // m) * m


def _slab_geometry(n, itemsize):
    """Pick (lanes, block_rows) for a flat array of n elements.

    Returns None when n is not a multiple of 128 (ragged -> 1D path).
    No padding is ever introduced: the grid uses pl.cdiv and Pallas masks
    the partial boundary block.
    """
    for lanes in (1024, 512, 256, 128):
        if n % lanes == 0:
            break
    else:
        return None  # ragged size, handled by the 1D path
    rows = n // lanes
    # Sub-32-bit dtypes pack along sublanes.
    sub = {4: 8, 2: 16, 1: 32}.get(itemsize, 8)
    if rows <= sub:
        # Single block equal to the full array (allowed even if rows % sub != 0).
        return lanes, rows
    max_block_rows = max(sub, (_TARGET_BLOCK_BYTES // (lanes * itemsize)) // sub * sub)
    # Cap at ~half the rows so the grid has >= 2 programs whenever possible
    # (lets dimension_semantics=("parallel",) shard across v7x's 2 TensorCores).
    half_rows = _round_up(pl.cdiv(rows, 2), sub)
    block_rows = min(max_block_rows, half_rows)
    return lanes, block_rows


# ---------------- Pallas backward kernel: out = (-alpha) * g ----------------

def _grl_bwd_kernel(scale_ref, g_ref, o_ref):
    # scale_ref (SMEM, f32[1]) holds -alpha. Multiply in the gradient's
    # native dtype (bf16 stays bf16 on v6e/v7x; f32 stays f32).
    s = scale_ref[0].astype(o_ref.dtype)
    o_ref[...] = g_ref[...] * s


def _neg_scale_pallas(g, alpha):
    """Elementwise -alpha * g via Pallas, any shape/dtype, no pad/slice passes."""
    shape, dtype = g.shape, g.dtype
    n = g.size
    if n == 0:
        return g

    neg_alpha = (-jnp.asarray(alpha, jnp.float32)).reshape(1)
    flat = g.reshape(-1)
    compiler_params = pltpu.CompilerParams(
        dimension_semantics=("parallel",),
        vmem_limit_bytes=_VMEM_LIMIT_BYTES,
    )
    smem_spec = pl.BlockSpec(memory_space=pltpu.MemorySpace.SMEM)

    geom = _slab_geometry(n, jnp.dtype(dtype).itemsize)
    if geom is not None:
        # Lane-dense 2D slab path: reshape is free (metadata only), no padding.
        lanes, block_rows = geom
        rows = n // lanes
        slab = flat.reshape(rows, lanes)
        out = pl.pallas_call(
            _grl_bwd_kernel,
            out_shape=jax.ShapeDtypeStruct((rows, lanes), dtype),
            grid=(pl.cdiv(rows, block_rows),),
            in_specs=[
                smem_spec,
                pl.BlockSpec((block_rows, lanes), lambda i: (i, 0)),
            ],
            out_specs=pl.BlockSpec((block_rows, lanes), lambda i: (i, 0)),
            input_output_aliases={1: 0},   # reuse g's HBM buffer
            compiler_params=compiler_params,
        )(neg_alpha, slab)
        return out.reshape(shape)

    # Ragged path (n not a multiple of 128): 1D masked blocks, no pad / slice.
    block = n if n <= _BLOCK_1D else _BLOCK_1D
    out = pl.pallas_call(
        _grl_bwd_kernel,
        out_shape=jax.ShapeDtypeStruct((n,), dtype),
        grid=(pl.cdiv(n, block),),
        in_specs=[
            smem_spec,
            pl.BlockSpec((block,), lambda i: (i,)),
        ],
        out_specs=pl.BlockSpec((block,), lambda i: (i,)),
        input_output_aliases={1: 0},
        compiler_params=compiler_params,
    )(neg_alpha, flat)
    return out.reshape(shape)


# ---------------- custom VJP: identity fwd, -alpha * g bwd ----------------

@jax.custom_vjp
def gradient_reversal(x, alpha):
    # Forward is an exact identity: no kernel launch, no HBM traffic.
    return x


def _grl_fwd(x, alpha):
    return x, alpha


def _grl_bwd(alpha, g):
    # x cotangent is -alpha * g (Pallas); alpha gets a zero cotangent
    # (matches PyTorch's `return output, None`).
    return _neg_scale_pallas(g, alpha), jnp.zeros_like(jnp.asarray(alpha, jnp.float32))


gradient_reversal.defvjp(_grl_fwd, _grl_bwd)


class GradientReversalLayer:
    """JAX/Pallas equivalent of the PyTorch GradientReversalLayer."""

    def __init__(self, alpha):
        # Traced scalar: annealing alpha during DANN training does NOT retrace
        # or recompile the Pallas kernel.
        self.alpha = jnp.float32(alpha)

    def __call__(self, x):
        return gradient_reversal(x, self.alpha)


# ---------------- demo ----------------

if __name__ == "__main__":
    key = jax.random.PRNGKey(0)
    alpha = 0.7
    layer = GradientReversalLayer(alpha)

    # NCHW input, matching the PyTorch conv-style usage.
    x = jax.random.normal(key, (2, 4, 16, 16), dtype=jnp.float32)

    # Forward: exact identity, zero-cost.
    y = layer(x)
    jax.block_until_ready(y)
    assert y.shape == x.shape and y.dtype == x.dtype
    assert bool(jnp.all(y == x))

    # Backward: grad of sum(y) wrt x must be -alpha everywhere (Pallas kernel).
    grad_x = jax.grad(lambda xx: jnp.sum(layer(xx)))(x)
    jax.block_until_ready(grad_x)
    assert grad_x.shape == x.shape and grad_x.dtype == x.dtype
    assert bool(jnp.allclose(grad_x, -alpha * jnp.ones_like(x), atol=1e-6))

    # bf16 gradients exercise the native-dtype multiply path.
    xb = jax.random.normal(jax.random.PRNGKey(2), (2, 4, 16, 16), dtype=jnp.bfloat16)
    grad_xb = jax.grad(lambda xx: jnp.sum(layer(xx).astype(jnp.float32)))(xb)
    jax.block_until_ready(grad_xb)
    assert grad_xb.dtype == jnp.bfloat16
    assert bool(jnp.allclose(grad_xb.astype(jnp.float32),
                             -alpha * jnp.ones(xb.shape, jnp.float32), rtol=1e-2))

    # Ragged (non-128-aligned) size exercises the masked 1D path (no pad/slice).
    x2 = jax.random.normal(jax.random.PRNGKey(1), (3, 5, 7), dtype=jnp.float32)
    grad_x2 = jax.grad(lambda xx: jnp.sum(layer(xx)))(x2)
    jax.block_until_ready(grad_x2)
    assert bool(jnp.allclose(grad_x2, -alpha * jnp.ones_like(x2), atol=1e-6))

    print("KERNEL_OK")
</pallas_src>

<mosaic_0001>
module attributes {stable_mosaic.version = 11 : i64} {
  func.func @_grl_bwd_kernel(%arg0: i32, %arg1: memref<1xf32, #tpu.memory_space<smem>>, %arg2: memref<2x1024xf32, #tpu.memory_space<vmem>>, %arg3: memref<2x1024xf32, #tpu.memory_space<vmem>>) attributes {dimension_semantics = [#tpu.dimension_semantics<parallel>], iteration_bounds = array<i64: 1>, scalar_prefetch = 0 : i64, scratch_operands = 0 : i64, tpu.core_type = #tpu.core_type<tc>, window_params = [{transform_indices = @transform_0, window_bounds = array<i64: 1>}, {transform_indices = @transform_1, window_bounds = array<i64: 2, 1024>}, {transform_indices = @transform_2, window_bounds = array<i64: 2, 1024>}]} {
    %c0 = arith.constant 0 : index
    %0 = memref.load %arg1[%c0] : memref<1xf32, #tpu.memory_space<smem>>
    %c0_0 = arith.constant 0 : index
    %c0_1 = arith.constant 0 : index
    %1 = vector.load %arg2[%c0_0, %c0_1] : memref<2x1024xf32, #tpu.memory_space<vmem>>, vector<2x1024xf32>
    %2 = vector.broadcast %0 : f32 to vector<2x1024xf32>
    %3 = arith.mulf %1, %2 : vector<2x1024xf32>
    %c0_2 = arith.constant 0 : index
    %c0_3 = arith.constant 0 : index
    %4 = vector.load %arg3[%c0_2, %c0_3] : memref<2x1024xf32, #tpu.memory_space<vmem>>, vector<2x1024xf32>
    tpu.vector_store %arg3[%c0_2, %c0_3], %3 {strides = array<i32>} : memref<2x1024xf32, #tpu.memory_space<vmem>>, vector<2x1024xf32>,
    return
  }
  func.func @transform_0(%arg0: i32) -> i32 {
    %c0_i32 = arith.constant 0 : i32
    %c0_i32_0 = arith.constant 0 : i32
    return %c0_i32 : i32
  }
  func.func @transform_1(%arg0: i32) -> (i32, i32) {
    %c0_i32 = arith.constant 0 : i32
    %c0_i32_0 = arith.constant 0 : i32
    return %arg0, %c0_i32 : i32, i32
  }
  func.func @transform_2(%arg0: i32) -> (i32, i32) {
    %c0_i32 = arith.constant 0 : i32
    %c0_i32_0 = arith.constant 0 : i32
    return %arg0, %c0_i32 : i32, i32
  }
}

</mosaic_0001>

<llo_original>
// kernel: tpu_custom_call.1
$region0: #{tpu_custom_call.1}
  #allocation0 [shape = 'u32[]', space=smem, size = 0x4, offset = 0x4, fixed_abs, tag = 'smem constant byte address 0x4 - core index']
  #allocation1 [shape = 'u32[144,128]{1,0:T(1,128)}', space=vmem, size = 0x12000, scoped, tag = 'internal scratch']
  #allocation2 [shape = 'f32[1]{0:T(128)S(6)}', space=smem, size = 0x200, scoped, tag = 'scoped memory for tpu_custom_call.1']
  %s0 = inlined_call_operand.<no memory space> [shape: f32[1], index: 0, kind: input, shape index: {}]
  %s1 = inlined_call_operand.hbm [shape: f32[2,1024], index: 1, kind: input, shape index: {}, may-alias: {1,2}]
  %s2 = inlined_call_operand.hbm [shape: f32[2,1024], index: 2, kind: output, shape index: {}, may-alias: {1,2}]
  %s3 = sld [smem:[#allocation0]]
  $region22: #{tpu_custom_call.1} parent=0
    _
  %s5 = ssub.s32 1, %s3
  %s6 = scalar_select 0, %s5, %s3
  %7 = sst [smem:[#allocation2]] %s0
  $region1: #{tpu_custom_call.1} parent=0
    #allocation3 [shape = 'u8[8192]{0}', space=vmem, size = 0x2000, scoped, tag = 'input window, operand 1, single buffered']
    #allocation4 [shape = 's32[1]{0}', space=sflag, size = 0x4, scoped, tag = 'scoped memory for tpu_custom_call.1']
    #allocation5 [shape = 's32[1]{0}', space=sflag, size = 0x4, scoped, tag = 'scoped memory for tpu_custom_call.1']
    #allocation6 [shape = 'u8[8192]{0}', space=vmem, size = 0x2000, scoped, tag = 'output window, operand 0, single buffered']
    %8 = vsyncpa [#allocation4], 0
    %9 = vsyncpa [#allocation5], 0
    // Predicated region
    $region2: #{tpu_custom_call.1} parent=1 // pred_check
      _
    $region3: #{tpu_custom_call.1} parent=1 // pred_check_branch
      %11 = sbr.rel (0) target = $region5
    $region4: #{tpu_custom_call.1} parent=1 // pred_region
      _
    $region5: #{tpu_custom_call.1} parent=1 // pred_fallthru
      _
    // Predicated region
    $region6: #{tpu_custom_call.1} parent=1 // pred_check
      _
    $region7: #{tpu_custom_call.1} parent=1 // pred_check_branch
      %13 = sbr.rel (0) target = $region9
    $region8: #{tpu_custom_call.1} parent=1 // pred_region
      %s15 = ssub.s32 256, 256
      %16 = vsyncadd [#allocation4], %s15
      %s18 = sshll.u32 [#allocation3], 4
      %s19 = int_to_ptr.vmem [resolvable:$true] %s18
      %21 = dma.hbm_to_vmem [thread:$0]  %s1, 256, %s19, [#allocation4]
    $region9: #{tpu_custom_call.1} parent=1 // pred_fallthru
      _
    // Predicated region
    $region10: #{tpu_custom_call.1} parent=1 // pred_check
      _
    $region11: #{tpu_custom_call.1} parent=1 // pred_check_branch
      %23 = sbr.rel (0) target = $region13
    $region12: #{tpu_custom_call.1} parent=1 // pred_region
      %24 = dma.done [#allocation4], 256
    $region13: #{tpu_custom_call.1} parent=1 // pred_fallthru
      _
    %s25 = sld [smem:[#allocation2]]
    %v26 = vld [vmem:[#allocation3] sm:$0xff]
    %v27 = vld [vmem:[#allocation3 + $0x8] sm:$0xff]
    %v28 = vstv %s25
    %v29 = vmul.f32 %v26, %v28
    %v30 = vmul.f32 %v27, %v28
    %31 = vst [vmem:[#allocation6] sm:$0xff] %v29
    %32 = vst [vmem:[#allocation6 + $0x8] sm:$0xff] %v30
    // Predicated region
    $region14: #{tpu_custom_call.1} parent=1 // pred_check
      _
    $region15: #{tpu_custom_call.1} parent=1 // pred_check_branch
      %34 = sbr.rel (0) target = $region17
    $region16: #{tpu_custom_call.1} parent=1 // pred_region
      %s36 = ssub.s32 256, 256
      %37 = vsyncadd [#allocation5], %s36
      %s39 = sshll.u32 [#allocation6], 4
      %s40 = int_to_ptr.vmem [resolvable:$true] %s39
      %42 = dma.vmem_to_hbm [thread:$0]  %s40, 256, %s2, [#allocation5]
    $region17: #{tpu_custom_call.1} parent=1 // pred_fallthru
      _
    // Predicated region
    $region18: #{tpu_custom_call.1} parent=1 // pred_check
      _
    $region19: #{tpu_custom_call.1} parent=1 // pred_check_branch
      %44 = sbr.rel (0) target = $region21
    $region20: #{tpu_custom_call.1} parent=1 // pred_region
      %45 = dma.done [#allocation5], 256
    $region21: #{tpu_custom_call.1} parent=1 // pred_fallthru
      _
    %46 = vsyncpa [#allocation4], 1
    %47 = vsyncpa [#allocation5], 1

</llo_original>
